<compile_context>
chip_gen: v6e
topology: v6e:2x2x1
jax: 0.10.0
libtpu: 0.0.40
codegen_flags: <defaults>
</compile_context>

<pallas_src>
import functools
import math

import jax
import jax.numpy as jnp
from jax.experimental import pallas as pl
from jax.experimental.pallas import tpu as pltpu


def _rmsnorm_kernel(x_ref, w_ref, o_ref, *, eps, inv_c):
    # x_ref: (TM, C_pad) block of tokens, w_ref: (1, C_pad) resident weight.
    x = x_ref[...].astype(jnp.float32)                        # single upcast
    # sum * (1/true_C): padded zero lanes (if any) don't perturb the mean.
    ms = jnp.sum(x * x, axis=-1, keepdims=True) * inv_c       # (TM, 1) lane reduce
    inv = jax.lax.rsqrt(ms + eps)                             # EUP rsqrt
    w = w_ref[...].astype(jnp.float32)                        # (1, C_pad), broadcasts
    o_ref[...] = (x * inv * w).astype(o_ref.dtype)            # cast once at store


def _choose_tm(n_rows, c_pad, itemsize, vmem_budget_bytes):
    """Pick the row-tile height from a VMEM byte budget.

    Per-row footprint: double-buffered x tile + double-buffered out tile
    (BlockSpec pipelining) plus ~3 f32 temporaries in the kernel body
    (the f32 upcast, x*x, and the x*inv*w product).
    """
    per_row = (2 + 2) * c_pad * itemsize + 3 * c_pad * 4
    tm = vmem_budget_bytes // per_row
    tm = (tm // 8) * 8                       # sublane multiple
    tm = max(8, min(tm, 1024))               # beyond ~1K rows there's no gain
    # Don't allocate a tile taller than the (8-rounded) number of rows.
    tm = min(tm, max(8, ((n_rows + 7) // 8) * 8))
    return int(tm)


def rmsnorm(x, weight, *, eps=1e-6, dim=-1, vmem_budget_mib=40):
    """Pallas TPU RMSNorm.

    x: (..., C) array (any leading dims); weight: (C,).
    `dim` other than the last axis is handled by moving it last in the
    wrapper (layout plumbing only).
    """
    orig_dtype = x.dtype
    nd = x.ndim
    axis = dim % nd
    if axis != nd - 1:
        x = jnp.moveaxis(x, axis, -1)
    shape = x.shape
    C = shape[-1]
    N = math.prod(shape[:-1]) if len(shape) > 1 else 1
    xf = x.reshape(N, C)
    w2 = weight.reshape(1, C)

    # Lane-dense last dim: pad C to a multiple of 128 only when necessary so
    # loads/stores are full-lane (unmasked).  The reduction uses 1/true_C.
    C_pad = ((C + 127) // 128) * 128
    if C_pad != C:
        xf = jnp.pad(xf, ((0, 0), (0, C_pad - C)))
        w2 = jnp.pad(w2, ((0, 0), (0, C_pad - C)))

    itemsize = jnp.dtype(orig_dtype).itemsize
    tm = _choose_tm(N, C_pad, itemsize, vmem_budget_mib * 1024 * 1024)

    grid = (pl.cdiv(N, tm),)  # ragged last block: OOB writes are masked by Pallas

    cost = pl.CostEstimate(
        flops=3 * N * C,
        transcendentals=N,
        bytes_accessed=2 * N * C * itemsize + C * itemsize,
    )

    out = pl.pallas_call(
        functools.partial(_rmsnorm_kernel, eps=float(eps), inv_c=1.0 / float(C)),
        out_shape=jax.ShapeDtypeStruct((N, C_pad), orig_dtype),
        grid=grid,
        in_specs=[
            pl.BlockSpec((tm, C_pad), lambda i: (i, 0)),   # x tile (pipelined)
            pl.BlockSpec((1, C_pad), lambda i: (0, 0)),    # weight (VMEM-resident)
        ],
        out_specs=pl.BlockSpec((tm, C_pad), lambda i: (i, 0)),
        compiler_params=pltpu.CompilerParams(
            dimension_semantics=("parallel",),             # shard rows across TCs
            vmem_limit_bytes=48 * 1024 * 1024,             # v7x-safe (64 MiB physical)
        ),
        cost_estimate=cost,
    )(xf, w2)

    if C_pad != C:
        out = out[:, :C]
    out = out.reshape(shape)
    if axis != nd - 1:
        out = jnp.moveaxis(out, -1, axis)
    return out


def _reference_rmsnorm(x, weight, eps=1e-6, dim=-1):
    # Pure-JAX reference reproducing the PyTorch forward semantics.
    dtype = x.dtype
    xf = x.astype(jnp.float32)
    norm = jnp.mean(xf * xf, axis=dim, keepdims=True)
    xn = xf * jax.lax.rsqrt(norm + eps)
    return (xn * weight.astype(jnp.float32)).astype(dtype)


if __name__ == "__main__":
    # Small config consistent with the module: hidden size = 32, (B, T) = (2, 8).
    B, T, C = 2, 8, 32
    key = jax.random.PRNGKey(0)
    kx, kw = jax.random.split(key)

    x = jax.random.normal(kx, (B, T, C), dtype=jnp.float32)
    weight = 1.0 + 0.1 * jax.random.normal(kw, (C,), dtype=jnp.float32)

    # f32 path (exercises the C-padding / lane-dense path since 32 % 128 != 0)
    y = rmsnorm(x, weight, eps=1e-6)
    y = jax.block_until_ready(y)
    y_ref = _reference_rmsnorm(x, weight, eps=1e-6)
    assert y.shape == (B, T, C)
    assert y.dtype == x.dtype
    assert jnp.allclose(y, y_ref, rtol=1e-5, atol=1e-5), "f32 mismatch vs reference"

    # bf16 path (exercises the single upcast / single downcast-at-store)
    x_bf = x.astype(jnp.bfloat16)
    w_bf = weight.astype(jnp.bfloat16)
    y_bf = jax.block_until_ready(rmsnorm(x_bf, w_bf, eps=1e-6))
    y_bf_ref = _reference_rmsnorm(x_bf, w_bf, eps=1e-6)
    assert y_bf.dtype == jnp.bfloat16
    assert jnp.allclose(y_bf.astype(jnp.float32), y_bf_ref.astype(jnp.float32),
                        rtol=2e-2, atol=2e-2), "bf16 mismatch vs reference"

    # Lane-dense C with a ragged row count (exercises the no-pad N path).
    N2, C2 = 300, 256
    x2 = jax.random.normal(jax.random.PRNGKey(1), (N2, C2), dtype=jnp.float32)
    w2 = 1.0 + 0.1 * jax.random.normal(jax.random.PRNGKey(2), (C2,), dtype=jnp.float32)
    y2 = jax.block_until_ready(rmsnorm(x2, w2, eps=1e-6))
    y2_ref = _reference_rmsnorm(x2, w2, eps=1e-6)
    assert jnp.allclose(y2, y2_ref, rtol=1e-5, atol=1e-5), "ragged-N mismatch vs reference"

    print("KERNEL_OK")
</pallas_src>

<mosaic_0001>
module attributes {stable_mosaic.version = 11 : i64} {
  func.func @_rmsnorm_kernel(%arg0: i32, %arg1: memref<16x128xf32, #tpu.memory_space<vmem>>, %arg2: memref<1x128xf32, #tpu.memory_space<vmem>>, %arg3: memref<16x128xf32, #tpu.memory_space<vmem>>) attributes {dimension_semantics = [#tpu.dimension_semantics<parallel>], iteration_bounds = array<i64: 1>, scalar_prefetch = 0 : i64, scratch_operands = 0 : i64, tpu.core_type = #tpu.core_type<tc>, window_params = [{transform_indices = @transform_0, window_bounds = array<i64: 16, 128>}, {pipeline_mode = #tpu.pipeline_mode<synchronous>, transform_indices = @transform_1, window_bounds = array<i64: 1, 128>}, {transform_indices = @transform_2, window_bounds = array<i64: 16, 128>}]} {
    %c0 = arith.constant 0 : index
    %c0_0 = arith.constant 0 : index
    %0 = vector.load %arg1[%c0, %c0_0] : memref<16x128xf32, #tpu.memory_space<vmem>>, vector<16x128xf32>
    %1 = arith.mulf %0, %0 : vector<16x128xf32>
    %cst = arith.constant dense<0.000000e+00> : vector<16xf32>
    %2 = vector.multi_reduction <add>, %1, %cst [1] : vector<16x128xf32> to vector<16xf32>
    %3 = vector.shape_cast %2 : vector<16xf32> to vector<16x1xf32>
    %cst_1 = arith.constant 3.125000e-02 : f32
    %4 = vector.broadcast %cst_1 : f32 to vector<16x1xf32>
    %5 = arith.mulf %3, %4 : vector<16x1xf32>
    %cst_2 = arith.constant 9.99999997E-7 : f32
    %6 = vector.broadcast %cst_2 : f32 to vector<16x1xf32>
    %7 = arith.addf %5, %6 : vector<16x1xf32>
    %8 = math.rsqrt %7 : vector<16x1xf32>
    %c0_3 = arith.constant 0 : index
    %c0_4 = arith.constant 0 : index
    %9 = vector.load %arg2[%c0_3, %c0_4] : memref<1x128xf32, #tpu.memory_space<vmem>>, vector<1x128xf32>
    %10 = vector.broadcast %8 : vector<16x1xf32> to vector<16x128xf32>
    %11 = arith.mulf %0, %10 : vector<16x128xf32>
    %12 = vector.broadcast %9 : vector<1x128xf32> to vector<16x128xf32>
    %13 = arith.mulf %11, %12 : vector<16x128xf32>
    %c0_5 = arith.constant 0 : index
    %c0_6 = arith.constant 0 : index
    %14 = vector.load %arg3[%c0_5, %c0_6] : memref<16x128xf32, #tpu.memory_space<vmem>>, vector<16x128xf32>
    tpu.vector_store %arg3[%c0_5, %c0_6], %13 {strides = array<i32>} : memref<16x128xf32, #tpu.memory_space<vmem>>, vector<16x128xf32>,
    return
  }
  func.func @transform_0(%arg0: i32) -> (i32, i32) {
    %c0_i32 = arith.constant 0 : i32
    %c0_i32_0 = arith.constant 0 : i32
    return %arg0, %c0_i32 : i32, i32
  }
  func.func @transform_1(%arg0: i32) -> (i32, i32) {
    %c0_i32 = arith.constant 0 : i32
    %c0_i32_0 = arith.constant 0 : i32
    %c0_i32_1 = arith.constant 0 : i32
    return %c0_i32, %c0_i32_0 : i32, i32
  }
  func.func @transform_2(%arg0: i32) -> (i32, i32) {
    %c0_i32 = arith.constant 0 : i32
    %c0_i32_0 = arith.constant 0 : i32
    return %arg0, %c0_i32 : i32, i32
  }
}

</mosaic_0001>

<llo_original>
// kernel: tpu_custom_call.1
$region0: #{tpu_custom_call.1}
  #allocation0 [shape = 'u32[]', space=smem, size = 0x4, offset = 0x4, fixed_abs, tag = 'smem constant byte address 0x4 - core index']
  #allocation1 [shape = 'u32[144,128]{1,0:T(1,128)}', space=vmem, size = 0x12000, scoped, tag = 'internal scratch']
  %s0 = inlined_call_operand.hbm [shape: f32[16,128], index: 0, kind: input, shape index: {}]
  %s1 = inlined_call_operand.vmem [shape: f32[1,128], index: 1, kind: input, shape index: {}]
  %s2 = inlined_call_operand.hbm [shape: f32[16,128], index: 2, kind: output, shape index: {}]
  %s3 = sld [smem:[#allocation0]]
  $region22: #{tpu_custom_call.1} parent=0
    _
  %s5 = ssub.s32 1, %s3
  %s6 = scalar_select 0, %s5, %s3
  $region1: #{tpu_custom_call.1} parent=0
    #allocation2 [shape = 'u8[8192]{0}', space=vmem, size = 0x2000, scoped, tag = 'input window, operand 0, single buffered']
    #allocation3 [shape = 's32[1]{0}', space=sflag, size = 0x4, scoped, tag = 'scoped memory for tpu_custom_call.1']
    #allocation4 [shape = 's32[1]{0}', space=sflag, size = 0x4, scoped, tag = 'scoped memory for tpu_custom_call.1']
    #allocation5 [shape = 'u8[8192]{0}', space=vmem, size = 0x2000, scoped, tag = 'output window, operand 0, single buffered']
    %7 = vsyncpa [#allocation3], 0
    %8 = vsyncpa [#allocation4], 0
    // Predicated region
    $region2: #{tpu_custom_call.1} parent=1 // pred_check
      _
    $region3: #{tpu_custom_call.1} parent=1 // pred_check_branch
      %10 = sbr.rel (0) target = $region5
    $region4: #{tpu_custom_call.1} parent=1 // pred_region
      %s12 = ssub.s32 256, 256
      %13 = vsyncadd [#allocation3], %s12
      %s14 = sshll.u32 [#allocation2], 4
      %s15 = int_to_ptr.vmem [resolvable:$true] %s14
      %20 = dma.hbm_to_vmem [thread:$0]  %s0, 256, %s15, [#allocation3], 128, 128, 8
    $region5: #{tpu_custom_call.1} parent=1 // pred_fallthru
      _
    // Predicated region
    $region6: #{tpu_custom_call.1} parent=1 // pred_check
      _
    $region7: #{tpu_custom_call.1} parent=1 // pred_check_branch
      %22 = sbr.rel (0) target = $region9
    $region8: #{tpu_custom_call.1} parent=1 // pred_region
      _
    $region9: #{tpu_custom_call.1} parent=1 // pred_fallthru
      _
    // Predicated region
    $region10: #{tpu_custom_call.1} parent=1 // pred_check
      _
    $region11: #{tpu_custom_call.1} parent=1 // pred_check_branch
      %24 = sbr.rel (0) target = $region13
    $region12: #{tpu_custom_call.1} parent=1 // pred_region
      %25 = dma.done [#allocation3], 256
    $region13: #{tpu_custom_call.1} parent=1 // pred_fallthru
      _
    %v26 = vld [vmem:[#allocation2] sm:$0xff]
    %v27 = vld [vmem:[#allocation2 + $0x8] sm:$0xff]
    %v28 = vmul.f32 %v26, %v26
    %v29 = vmul.f32 %v27, %v27
    %30 = vadd.xlane.f32.xlu0 %v28
    %v31 = vpop.xlane.xlu0 %30
    %32 = vadd.xlane.f32.xlu0 %v29
    %v33 = vpop.xlane.xlu0 %32
    %v34 = vmul.f32 %v31, 0.03125
    %v35 = vmul.f32 %v33, 0.03125
    %v36 = vadd.f32 %v34, 1e-06
    %v37 = vadd.f32 %v35, 1e-06
    %v38 = vrsqrt.pop %v36
    %v39 = vrsqrt.pop %v37
    %v40 = vld [vmem:[%s1] sm:$0x1]
    %v41 = vmul.f32 %v26, %v38
    %v42 = vmul.f32 %v27, %v39
    %v44 = vlaneseq
    %v45 = vshrl.u32 %v44, 7
    %v46 = vsub.s32 0, %v45
    %v47 = vrot.slane %v40, %v46
    %v49 = vmul.f32 %v41, %v47
    %v50 = vmul.f32 %v42, %v47
    %51 = vst [vmem:[#allocation5] sm:$0xff] %v49
    %52 = vst [vmem:[#allocation5 + $0x8] sm:$0xff] %v50
    // Predicated region
    $region14: #{tpu_custom_call.1} parent=1 // pred_check
      _
    $region15: #{tpu_custom_call.1} parent=1 // pred_check_branch
      %54 = sbr.rel (0) target = $region17
    $region16: #{tpu_custom_call.1} parent=1 // pred_region
      %s56 = ssub.s32 256, 256
      %57 = vsyncadd [#allocation4], %s56
      %s58 = sshll.u32 [#allocation5], 4
      %s59 = int_to_ptr.vmem [resolvable:$true] %s58
      %64 = dma.vmem_to_hbm [thread:$0]  %s59, 256, %s2, [#allocation4], 128, 128, 8
    $region17: #{tpu_custom_call.1} parent=1 // pred_fallthru
      _
    // Predicated region
    $region18: #{tpu_custom_call.1} parent=1 // pred_check
      _
    $region19: #{tpu_custom_call.1} parent=1 // pred_check_branch
      %66 = sbr.rel (0) target = $region21
    $region20: #{tpu_custom_call.1} parent=1 // pred_region
      %67 = dma.done [#allocation4], 256
    $region21: #{tpu_custom_call.1} parent=1 // pred_fallthru
      _
    %68 = vsyncpa [#allocation3], 1
    %69 = vsyncpa [#allocation4], 1

</llo_original>
